<compile_context>
chip_gen: v7x
topology: tpu7x:2x2x1
jax: 0.10.0
libtpu: 0.0.40
codegen_flags: <defaults>
</compile_context>

<pallas_src>
import functools
import math

import jax
import jax.numpy as jnp
from jax.experimental import pallas as pl
from jax.experimental.pallas import tpu as pltpu

_LN_EPS = 1e-6
_MIB = 1 << 20


def _pick_tile(n, candidates):
    """Largest candidate that evenly divides n, else the full extent."""
    for t in candidates:
        if n % t == 0:
            return t
    return n


def _clamp_vmem(estimate_bytes):
    # Explicit scoped-VMEM budget: floored at 16 MiB, capped at v7x's 64 MiB
    # physical VMEM (valid on v5e/v6e too).
    return int(min(max(estimate_bytes, 16 * _MIB), 64 * _MIB))


def _layernorm_f32(x_f32, gamma, beta):
    mean = jnp.mean(x_f32, axis=-1, keepdims=True)
    var = jnp.mean(jnp.square(x_f32 - mean), axis=-1, keepdims=True)
    y = (x_f32 - mean) * jax.lax.rsqrt(var + _LN_EPS)
    return y * gamma.astype(jnp.float32) + beta.astype(jnp.float32)


# --------------------------------------------------------------------------
# Fused [residual-scale -> LayerNorm -> MHA(enc,enc) -> +residual] kernel.
# Grid: (batch "parallel", query tiles "parallel", heads "arbitrary").
# The head axis streams one head's weight slices per step and accumulates
# ctx_h @ wo_h into a lane-dense [tq, H] f32 accumulator.
# --------------------------------------------------------------------------
def _attn_block_kernel(x_ref, enc_ref, g_ref, b_ref,
                       wq_ref, wk_ref, wv_ref, wo_ref,
                       o_ref, y_sc, enc_sc, acc_sc,
                       *, att_size, residual_scale):
    h = pl.program_id(2)

    @pl.when(h == 0)
    def _():
        x = x_ref[0].astype(jnp.float32)
        if residual_scale != 1.0:
            x = x * residual_scale
        acc_sc[...] = x                                           # residual seeds acc
        y_sc[...] = _layernorm_f32(x, g_ref[...], b_ref[...]).astype(y_sc.dtype)
        enc_sc[...] = enc_ref[0].astype(enc_sc.dtype)

    wq = wq_ref[0]            # [H, d]  bf16
    wk = wk_ref[0]            # [H, d]  bf16
    wv = wv_ref[0]            # [H, d]  bf16
    wo = wo_ref[0]            # [d, H]  bf16
    y = y_sc[...]             # [tq, H] bf16
    enc = enc_sc[...]         # [Skv,H] bf16

    # Per-head projections: full K=H contractions, bf16 in / f32 accumulate.
    q = jnp.dot(y, wq, preferred_element_type=jnp.float32) * (att_size ** -0.5)
    k = jnp.dot(enc, wk, preferred_element_type=jnp.float32)
    v = jnp.dot(enc, wv, preferred_element_type=jnp.float32)

    # Scores q @ k^T (contract over head dim d), softmax in f32.
    s = jax.lax.dot_general(q.astype(wq.dtype), k.astype(wk.dtype),
                            (((1,), (1,)), ((), ())),
                            preferred_element_type=jnp.float32)    # [tq, Skv]
    s = s - jnp.max(s, axis=-1, keepdims=True)
    p = jnp.exp(s)
    p = p * pl.reciprocal(jnp.sum(p, axis=-1, keepdims=True), approx=True)

    ctx = jnp.dot(p.astype(wv.dtype), v.astype(wv.dtype),
                  preferred_element_type=jnp.float32)              # [tq, d]
    # Head contribution to the output projection: lane-dense [tq, H] update.
    acc_sc[...] += jnp.dot(ctx.astype(wo.dtype), wo,
                           preferred_element_type=jnp.float32)

    @pl.when(h == pl.num_programs(2) - 1)
    def _():
        o_ref[0] = acc_sc[...].astype(o_ref.dtype)


def attention_block(x, enc, gamma, beta, wq, wk, wv, wo,
                    num_heads, residual_scale):
    B, Sq, H = x.shape
    _, Skv, _ = enc.shape
    d = H // num_heads
    tq = _pick_tile(Sq, (512, 256, 128))
    n_qt = Sq // tq

    w_dt = wq.dtype
    # Head-major weight views built once in the wrapper (free for the kernel):
    # wq/wk/wv -> [nh, H, d], wo -> [nh, d, H].
    wq_r = wq.reshape(H, num_heads, d).transpose(1, 0, 2)
    wk_r = wk.reshape(H, num_heads, d).transpose(1, 0, 2)
    wv_r = wv.reshape(H, num_heads, d).transpose(1, 0, 2)
    wo_r = wo.reshape(num_heads, d, H)

    xb = x.dtype.itemsize
    wb = jnp.dtype(w_dt).itemsize
    d_pad = max(d, 128)                       # lane padding of per-head blocks
    est = (2 * (tq * H * xb + Skv * H * xb + 4 * H * d_pad * wb + tq * H * xb)
           + tq * H * wb + Skv * H * wb + tq * H * 4          # scratches
           + 4 * tq * Skv * 4 + 4 * tq * H * 4                # s/p/q/k/v temps
           + 2 * _MIB)

    kernel = functools.partial(_attn_block_kernel, att_size=d,
                               residual_scale=residual_scale)
    return pl.pallas_call(
        kernel,
        out_shape=jax.ShapeDtypeStruct((B, Sq, H), x.dtype),
        grid=(B, n_qt, num_heads),
        in_specs=[
            pl.BlockSpec((1, tq, H), lambda b, i, h: (b, i, 0)),
            pl.BlockSpec((1, Skv, H), lambda b, i, h: (b, 0, 0)),
            pl.BlockSpec((1, H), lambda b, i, h: (0, 0)),
            pl.BlockSpec((1, H), lambda b, i, h: (0, 0)),
            pl.BlockSpec((1, H, d), lambda b, i, h: (h, 0, 0)),
            pl.BlockSpec((1, H, d), lambda b, i, h: (h, 0, 0)),
            pl.BlockSpec((1, H, d), lambda b, i, h: (h, 0, 0)),
            pl.BlockSpec((1, d, H), lambda b, i, h: (h, 0, 0)),
        ],
        out_specs=pl.BlockSpec((1, tq, H), lambda b, i, h: (b, i, 0)),
        scratch_shapes=[pltpu.VMEM((tq, H), w_dt),        # LN(y), bf16
                        pltpu.VMEM((Skv, H), w_dt),       # enc, bf16
                        pltpu.VMEM((tq, H), jnp.float32)],  # output accumulator
        compiler_params=pltpu.CompilerParams(
            dimension_semantics=("parallel", "parallel", "arbitrary"),
            vmem_limit_bytes=_clamp_vmem(est)),
    )(x, enc, gamma.reshape(1, H), beta.reshape(1, H), wq_r, wk_r, wv_r, wo_r)


# --------------------------------------------------------------------------
# Fused [residual-scale -> LayerNorm -> FFN -> +residual] kernel.
# Grid: (row tiles "parallel", filter tiles "arbitrary" accumulation axis).
# --------------------------------------------------------------------------
def _ffn_block_kernel(x_ref, g_ref, b_ref, w1_ref, b1_ref, w2_ref, b2_ref,
                      o_ref, y_ref, acc_ref, *, residual_scale):
    f = pl.program_id(1)

    @pl.when(f == 0)
    def _():
        x = x_ref[...].astype(jnp.float32)
        if residual_scale != 1.0:
            x = x * residual_scale
        acc_ref[...] = x                       # residual seeds the accumulator
        y_ref[...] = _layernorm_f32(x, g_ref[...], b_ref[...]).astype(y_ref.dtype)

    w1 = w1_ref[...]                           # [H, tile_f]   bf16
    w2 = w2_ref[...]                           # [tile_f, H]   bf16
    h = jnp.dot(y_ref[...], w1, preferred_element_type=jnp.float32)
    h = jnp.maximum(h + b1_ref[...].astype(jnp.float32), 0.0)
    acc_ref[...] += jnp.dot(h.astype(w2.dtype), w2,
                            preferred_element_type=jnp.float32)

    @pl.when(f == pl.num_programs(1) - 1)
    def _():
        o_ref[...] = (acc_ref[...] + b2_ref[...].astype(jnp.float32)).astype(o_ref.dtype)


def ffn_block(x2d, gamma, beta, w1, b1, w2, b2, residual_scale):
    N, H = x2d.shape
    F = w1.shape[1]
    # tile_f capped at 1024 so the streamed bf16 weight blocks stay small on
    # v7x; tile_n up to 1024 so the full-F weight sweep repeats fewer times.
    tile_n = _pick_tile(N, (1024, 512, 256, 128, 64, 32, 16, 8))
    tile_f = _pick_tile(F, (1024, 512, 256, 128))
    w_dt = w1.dtype
    wb = jnp.dtype(w_dt).itemsize
    xb = x2d.dtype.itemsize
    est = (2 * (2 * tile_n * H * xb + 2 * H * tile_f * wb + tile_f * 4 + H * 4)
           + tile_n * H * wb + tile_n * H * 4            # scratches
           + 2 * tile_n * tile_f * 4                     # h temporaries
           + 2 * _MIB)

    kernel = functools.partial(_ffn_block_kernel, residual_scale=residual_scale)
    return pl.pallas_call(
        kernel,
        out_shape=jax.ShapeDtypeStruct((N, H), x2d.dtype),
        grid=(N // tile_n, F // tile_f),
        in_specs=[
            pl.BlockSpec((tile_n, H), lambda i, f: (i, 0)),
            pl.BlockSpec((1, H), lambda i, f: (0, 0)),
            pl.BlockSpec((1, H), lambda i, f: (0, 0)),
            pl.BlockSpec((H, tile_f), lambda i, f: (0, f)),
            pl.BlockSpec((1, tile_f), lambda i, f: (0, f)),
            pl.BlockSpec((tile_f, H), lambda i, f: (f, 0)),
            pl.BlockSpec((1, H), lambda i, f: (0, 0)),
        ],
        out_specs=pl.BlockSpec((tile_n, H), lambda i, f: (i, 0)),
        scratch_shapes=[pltpu.VMEM((tile_n, H), w_dt),        # LN(y), bf16
                        pltpu.VMEM((tile_n, H), jnp.float32)],  # accumulator
        compiler_params=pltpu.CompilerParams(
            dimension_semantics=("parallel", "arbitrary"),
            vmem_limit_bytes=_clamp_vmem(est)),
    )(x2d, gamma.reshape(1, H), beta.reshape(1, H),
      w1, b1.reshape(1, F), w2, b2.reshape(1, H))


# --------------------------------------------------------------------------
# DecoderLayer forward
# --------------------------------------------------------------------------
def decoder_layer(x, enc_output, p, num_heads):
    B, S, H = x.shape
    # The self-attention block of the reference collapses to x <- x + x (its
    # attention output is discarded); the doubling is folded into the next
    # fused kernel via residual_scale=2.0 instead of an extra HBM pass.
    if enc_output is not None:
        x = attention_block(x, enc_output, p["ln2_g"], p["ln2_b"],
                            p["ed_wq"], p["ed_wk"], p["ed_wv"], p["ed_wo"],
                            num_heads, residual_scale=2.0)
        ffn_scale = 1.0
    else:
        ffn_scale = 2.0
    x2d = ffn_block(x.reshape(B * S, H), p["ln3_g"], p["ln3_b"],
                    p["ffn_w1"], p["ffn_b1"], p["ffn_w2"], p["ffn_b2"],
                    residual_scale=ffn_scale)
    return x2d.reshape(B, S, H)


# --------------------------------------------------------------------------
# Pure-JAX f32 reference (same semantics, same bf16-rounded weights).
# --------------------------------------------------------------------------
def _ref_ln(x, g, b):
    m = jnp.mean(x, -1, keepdims=True)
    v = jnp.mean((x - m) ** 2, -1, keepdims=True)
    return (x - m) / jnp.sqrt(v + _LN_EPS) * g + b


def _ref_mha(xq, xkv, wq, wk, wv, wo, nh):
    B, Sq, H = xq.shape
    d = H // nh
    q = (xq @ wq).reshape(B, Sq, nh, d).transpose(0, 2, 1, 3) * d ** (-0.5)
    k = (xkv @ wk).reshape(B, -1, nh, d).transpose(0, 2, 1, 3)
    v = (xkv @ wv).reshape(B, -1, nh, d).transpose(0, 2, 1, 3)
    s = jax.nn.softmax(q @ k.transpose(0, 1, 3, 2), axis=-1)
    ctx = (s @ v).transpose(0, 2, 1, 3).reshape(B, Sq, H)
    return ctx @ wo


def ref_decoder_layer(x, enc, p, nh):
    f32 = lambda a: a.astype(jnp.float32)
    x = x + x   # self-attention output discarded in the reference (dropout(x) added)
    if enc is not None:
        y = _ref_ln(x, p["ln2_g"], p["ln2_b"])
        y = _ref_mha(y, enc, f32(p["ed_wq"]), f32(p["ed_wk"]),
                     f32(p["ed_wv"]), f32(p["ed_wo"]), nh)
        x = x + y
    y = _ref_ln(x, p["ln3_g"], p["ln3_b"])
    y = jnp.maximum(y @ f32(p["ffn_w1"]) + p["ffn_b1"], 0.0) @ f32(p["ffn_w2"]) + p["ffn_b2"]
    x = x + y
    return x


# --------------------------------------------------------------------------
# Deterministic parameter init (xavier-uniform, zero biases, LN gamma=1 beta=0)
# Matmul weights are stored in bf16 (review item); LN params / biases in f32.
# --------------------------------------------------------------------------
def _xavier(key, fan_in, fan_out, dtype):
    bound = math.sqrt(6.0 / (fan_in + fan_out))
    w = jax.random.uniform(key, (fan_in, fan_out), jnp.float32, -bound, bound)
    return w.astype(dtype)


def init_params(key, hidden, filter_size, weight_dtype=jnp.bfloat16):
    ks = jax.random.split(key, 10)
    # ln1_* / sa_* parameters exist in the module but never affect its output
    # (self-attention result is discarded); kept here only for parity.
    return {
        "ln1_g": jnp.ones((hidden,), jnp.float32),
        "ln1_b": jnp.zeros((hidden,), jnp.float32),
        "sa_wq": _xavier(ks[0], hidden, hidden, weight_dtype),
        "sa_wk": _xavier(ks[1], hidden, hidden, weight_dtype),
        "sa_wv": _xavier(ks[2], hidden, hidden, weight_dtype),
        "sa_wo": _xavier(ks[3], hidden, hidden, weight_dtype),
        "ln2_g": jnp.ones((hidden,), jnp.float32),
        "ln2_b": jnp.zeros((hidden,), jnp.float32),
        "ed_wq": _xavier(ks[4], hidden, hidden, weight_dtype),
        "ed_wk": _xavier(ks[5], hidden, hidden, weight_dtype),
        "ed_wv": _xavier(ks[6], hidden, hidden, weight_dtype),
        "ed_wo": _xavier(ks[7], hidden, hidden, weight_dtype),
        "ln3_g": jnp.ones((hidden,), jnp.float32),
        "ln3_b": jnp.zeros((hidden,), jnp.float32),
        "ffn_w1": _xavier(ks[8], hidden, filter_size, weight_dtype),
        "ffn_b1": jnp.zeros((filter_size,), jnp.float32),
        "ffn_w2": _xavier(ks[9], filter_size, hidden, weight_dtype),
        "ffn_b2": jnp.zeros((hidden,), jnp.float32),
    }


if __name__ == "__main__":
    B, S, S_ENC, H, FILTER, HEADS = 2, 8, 8, 32, 64, 8

    key = jax.random.PRNGKey(0)
    k_x, k_enc, k_p = jax.random.split(key, 3)
    x = jax.random.normal(k_x, (B, S, H), jnp.float32)
    enc_output = jax.random.normal(k_enc, (B, S_ENC, H), jnp.float32)
    params = init_params(k_p, H, FILTER)

    out = jax.block_until_ready(decoder_layer(x, enc_output, params, HEADS))
    ref = ref_decoder_layer(x, enc_output, params, HEADS)
    assert out.shape == (B, S, H)
    err = float(jnp.max(jnp.abs(out - ref)))
    assert jnp.allclose(out, ref, rtol=5e-2, atol=5e-2), err

    # enc_output=None path (self-attention doubling folded into FFN kernel).
    out2 = jax.block_until_ready(decoder_layer(x, None, params, HEADS))
    ref2 = ref_decoder_layer(x, None, params, HEADS)
    err2 = float(jnp.max(jnp.abs(out2 - ref2)))
    assert jnp.allclose(out2, ref2, rtol=5e-2, atol=5e-2), err2

    print("KERNEL_OK")
</pallas_src>

<mosaic_0001>
module attributes {stable_mosaic.version = 11 : i64} {
  func.func @_attn_block_kernel(%arg0: i32, %arg1: i32, %arg2: i32, %arg3: memref<1x8x32xf32, #tpu.memory_space<vmem>>, %arg4: memref<1x8x32xf32, #tpu.memory_space<vmem>>, %arg5: memref<1x32xf32, #tpu.memory_space<vmem>>, %arg6: memref<1x32xf32, #tpu.memory_space<vmem>>, %arg7: memref<1x32x4xbf16, #tpu.memory_space<vmem>>, %arg8: memref<1x32x4xbf16, #tpu.memory_space<vmem>>, %arg9: memref<1x32x4xbf16, #tpu.memory_space<vmem>>, %arg10: memref<1x4x32xbf16, #tpu.memory_space<vmem>>, %arg11: memref<1x8x32xf32, #tpu.memory_space<vmem>>, %arg12: memref<8x32xbf16, #tpu.memory_space<vmem>>, %arg13: memref<8x32xbf16, #tpu.memory_space<vmem>>, %arg14: memref<8x32xf32, #tpu.memory_space<vmem>>) attributes {dimension_semantics = [#tpu.dimension_semantics<parallel>, #tpu.dimension_semantics<parallel>, #tpu.dimension_semantics<arbitrary>], iteration_bounds = array<i64: 2, 1, 8>, scalar_prefetch = 0 : i64, scratch_operands = 3 : i64, tpu.core_type = #tpu.core_type<tc>, window_params = [{transform_indices = @transform_0, window_bounds = array<i64: 1, 8, 32>}, {transform_indices = @transform_1, window_bounds = array<i64: 1, 8, 32>}, {pipeline_mode = #tpu.pipeline_mode<synchronous>, transform_indices = @transform_2, window_bounds = array<i64: 1, 32>}, {pipeline_mode = #tpu.pipeline_mode<synchronous>, transform_indices = @transform_3, window_bounds = array<i64: 1, 32>}, {transform_indices = @transform_4, window_bounds = array<i64: 1, 32, 4>}, {transform_indices = @transform_5, window_bounds = array<i64: 1, 32, 4>}, {transform_indices = @transform_6, window_bounds = array<i64: 1, 32, 4>}, {transform_indices = @transform_7, window_bounds = array<i64: 1, 4, 32>}, {transform_indices = @transform_8, window_bounds = array<i64: 1, 8, 32>}]} {
    %c0_i32 = arith.constant 0 : i32
    %0 = arith.cmpi eq, %arg2, %c0_i32 : i32
    %1 = arith.extui %0 : i1 to i32
    %c0_i32_0 = arith.constant 0 : i32
    %2 = arith.cmpi ne, %1, %c0_i32_0 : i32
    scf.if %2 {
      %c0_29 = arith.constant 0 : index
      %c0_30 = arith.constant 0 : index
      %c0_31 = arith.constant 0 : index
      %42 = vector.load %arg3[%c0_29, %c0_30, %c0_31] : memref<1x8x32xf32, #tpu.memory_space<vmem>>, vector<1x8x32xf32>
      %43 = vector.shape_cast %42 : vector<1x8x32xf32> to vector<8x32xf32>
      %cst_32 = arith.constant 2.000000e+00 : f32
      %44 = vector.broadcast %cst_32 : f32 to vector<8x32xf32>
      %45 = arith.mulf %43, %44 : vector<8x32xf32>
      %c0_33 = arith.constant 0 : index
      %c0_34 = arith.constant 0 : index
      %46 = vector.load %arg14[%c0_33, %c0_34] : memref<8x32xf32, #tpu.memory_space<vmem>>, vector<8x32xf32>
      tpu.vector_store %arg14[%c0_33, %c0_34], %45 {strides = array<i32>} : memref<8x32xf32, #tpu.memory_space<vmem>>, vector<8x32xf32>,
      %c0_35 = arith.constant 0 : index
      %c0_36 = arith.constant 0 : index
      %47 = vector.load %arg5[%c0_35, %c0_36] : memref<1x32xf32, #tpu.memory_space<vmem>>, vector<1x32xf32>
      %c0_37 = arith.constant 0 : index
      %c0_38 = arith.constant 0 : index
      %48 = vector.load %arg6[%c0_37, %c0_38] : memref<1x32xf32, #tpu.memory_space<vmem>>, vector<1x32xf32>
      %cst_39 = arith.constant dense<0.000000e+00> : vector<8xf32>
      %49 = vector.multi_reduction <add>, %45, %cst_39 [1] : vector<8x32xf32> to vector<8xf32>
      %50 = vector.shape_cast %49 : vector<8xf32> to vector<8x1xf32>
      %cst_40 = arith.constant 3.200000e+01 : f32
      %51 = vector.broadcast %cst_40 : f32 to vector<8x1xf32>
      %52 = arith.divf %50, %51 : vector<8x1xf32>
      %53 = vector.broadcast %52 : vector<8x1xf32> to vector<8x32xf32>
      %54 = arith.subf %45, %53 : vector<8x32xf32>
      %55 = arith.mulf %54, %54 : vector<8x32xf32>
      %cst_41 = arith.constant dense<0.000000e+00> : vector<8xf32>
      %56 = vector.multi_reduction <add>, %55, %cst_41 [1] : vector<8x32xf32> to vector<8xf32>
      %57 = vector.shape_cast %56 : vector<8xf32> to vector<8x1xf32>
      %cst_42 = arith.constant 3.200000e+01 : f32
      %58 = vector.broadcast %cst_42 : f32 to vector<8x1xf32>
      %59 = arith.divf %57, %58 : vector<8x1xf32>
      %60 = vector.broadcast %52 : vector<8x1xf32> to vector<8x32xf32>
      %61 = arith.subf %45, %60 : vector<8x32xf32>
      %cst_43 = arith.constant 9.99999997E-7 : f32
      %62 = vector.broadcast %cst_43 : f32 to vector<8x1xf32>
      %63 = arith.addf %59, %62 : vector<8x1xf32>
      %64 = math.rsqrt %63 : vector<8x1xf32>
      %65 = vector.broadcast %64 : vector<8x1xf32> to vector<8x32xf32>
      %66 = arith.mulf %61, %65 : vector<8x32xf32>
      %67 = vector.broadcast %47 : vector<1x32xf32> to vector<8x32xf32>
      %68 = arith.mulf %66, %67 : vector<8x32xf32>
      %69 = vector.broadcast %48 : vector<1x32xf32> to vector<8x32xf32>
      %70 = arith.addf %68, %69 : vector<8x32xf32>
      %71 = arith.truncf %70 : vector<8x32xf32> to vector<8x32xbf16>
      %c0_44 = arith.constant 0 : index
      %c0_45 = arith.constant 0 : index
      %72 = vector.load %arg12[%c0_44, %c0_45] : memref<8x32xbf16, #tpu.memory_space<vmem>>, vector<8x32xbf16>
      tpu.vector_store %arg12[%c0_44, %c0_45], %71 {strides = array<i32>} : memref<8x32xbf16, #tpu.memory_space<vmem>>, vector<8x32xbf16>,
      %c0_46 = arith.constant 0 : index
      %c0_47 = arith.constant 0 : index
      %c0_48 = arith.constant 0 : index
      %73 = vector.load %arg4[%c0_46, %c0_47, %c0_48] : memref<1x8x32xf32, #tpu.memory_space<vmem>>, vector<1x8x32xf32>
      %74 = vector.shape_cast %73 : vector<1x8x32xf32> to vector<8x32xf32>
      %75 = arith.truncf %74 : vector<8x32xf32> to vector<8x32xbf16>
      %c0_49 = arith.constant 0 : index
      %c0_50 = arith.constant 0 : index
      %76 = vector.load %arg13[%c0_49, %c0_50] : memref<8x32xbf16, #tpu.memory_space<vmem>>, vector<8x32xbf16>
      tpu.vector_store %arg13[%c0_49, %c0_50], %75 {strides = array<i32>} : memref<8x32xbf16, #tpu.memory_space<vmem>>, vector<8x32xbf16>,
    } else {
    }
    %c0 = arith.constant 0 : index
    %c0_1 = arith.constant 0 : index
    %c0_2 = arith.constant 0 : index
    %3 = vector.load %arg7[%c0, %c0_1, %c0_2] : memref<1x32x4xbf16, #tpu.memory_space<vmem>>, vector<1x32x4xbf16>
    %4 = vector.shape_cast %3 : vector<1x32x4xbf16> to vector<32x4xbf16>
    %c0_3 = arith.constant 0 : index
    %c0_4 = arith.constant 0 : index
    %c0_5 = arith.constant 0 : index
    %5 = vector.load %arg8[%c0_3, %c0_4, %c0_5] : memref<1x32x4xbf16, #tpu.memory_space<vmem>>, vector<1x32x4xbf16>
    %6 = vector.shape_cast %5 : vector<1x32x4xbf16> to vector<32x4xbf16>
    %c0_6 = arith.constant 0 : index
    %c0_7 = arith.constant 0 : index
    %c0_8 = arith.constant 0 : index
    %7 = vector.load %arg9[%c0_6, %c0_7, %c0_8] : memref<1x32x4xbf16, #tpu.memory_space<vmem>>, vector<1x32x4xbf16>
    %8 = vector.shape_cast %7 : vector<1x32x4xbf16> to vector<32x4xbf16>
    %c0_9 = arith.constant 0 : index
    %c0_10 = arith.constant 0 : index
    %c0_11 = arith.constant 0 : index
    %9 = vector.load %arg10[%c0_9, %c0_10, %c0_11] : memref<1x4x32xbf16, #tpu.memory_space<vmem>>, vector<1x4x32xbf16>
    %10 = vector.shape_cast %9 : vector<1x4x32xbf16> to vector<4x32xbf16>
    %c0_12 = arith.constant 0 : index
    %c0_13 = arith.constant 0 : index
    %11 = vector.load %arg12[%c0_12, %c0_13] : memref<8x32xbf16, #tpu.memory_space<vmem>>, vector<8x32xbf16>
    %c0_14 = arith.constant 0 : index
    %c0_15 = arith.constant 0 : index
    %12 = vector.load %arg13[%c0_14, %c0_15] : memref<8x32xbf16, #tpu.memory_space<vmem>>, vector<8x32xbf16>
    %cst = arith.constant dense<0.000000e+00> : vector<8x4xf32>
    %13 = tpu.matmul %11, %4, %cst {dimension_numbers = #tpu.dot_dimension_numbers<[1], [0], [0], [1], [0, 0, 1, 1], [], []>} : vector<8x32xbf16>, vector<32x4xbf16>, vector<8x4xf32> -> vector<8x4xf32>
    %cst_16 = arith.constant 5.000000e-01 : f32
    %14 = vector.broadcast %cst_16 : f32 to vector<8x4xf32>
    %15 = arith.mulf %13, %14 : vector<8x4xf32>
    %cst_17 = arith.constant dense<0.000000e+00> : vector<8x4xf32>
    %16 = tpu.matmul %12, %6, %cst_17 {dimension_numbers = #tpu.dot_dimension_numbers<[1], [0], [0], [1], [0, 0, 1, 1], [], []>} : vector<8x32xbf16>, vector<32x4xbf16>, vector<8x4xf32> -> vector<8x4xf32>
    %cst_18 = arith.constant dense<0.000000e+00> : vector<8x4xf32>
    %17 = tpu.matmul %12, %8, %cst_18 {dimension_numbers = #tpu.dot_dimension_numbers<[1], [0], [0], [1], [0, 0, 1, 1], [], []>} : vector<8x32xbf16>, vector<32x4xbf16>, vector<8x4xf32> -> vector<8x4xf32>
    %18 = arith.truncf %15 : vector<8x4xf32> to vector<8x4xbf16>
    %19 = arith.truncf %16 : vector<8x4xf32> to vector<8x4xbf16>
    %cst_19 = arith.constant dense<0.000000e+00> : vector<8x8xf32>
    %20 = tpu.matmul %18, %19, %cst_19 {dimension_numbers = #tpu.dot_dimension_numbers<[1], [1], [0], [0], [0, 0, 1, 0], [], []>} : vector<8x4xbf16>, vector<8x4xbf16>, vector<8x8xf32> -> vector<8x8xf32>
    %cst_20 = arith.constant dense<0xFF800000> : vector<8xf32>
    %21 = vector.multi_reduction <maximumf>, %20, %cst_20 [1] : vector<8x8xf32> to vector<8xf32>
    %22 = vector.shape_cast %21 : vector<8xf32> to vector<8x1xf32>
    %23 = vector.broadcast %22 : vector<8x1xf32> to vector<8x8xf32>
    %24 = arith.subf %20, %23 : vector<8x8xf32>
    %25 = math.exp %24 : vector<8x8xf32>
    %cst_21 = arith.constant dense<0.000000e+00> : vector<8xf32>
    %26 = vector.multi_reduction <add>, %25, %cst_21 [1] : vector<8x8xf32> to vector<8xf32>
    %27 = vector.shape_cast %26 : vector<8xf32> to vector<8x1xf32>
    %28 = tpu.reciprocal %27 {approx = true} : vector<8x1xf32> -> vector<8x1xf32>
    %29 = vector.broadcast %28 : vector<8x1xf32> to vector<8x8xf32>
    %30 = arith.mulf %25, %29 : vector<8x8xf32>
    %31 = arith.truncf %30 : vector<8x8xf32> to vector<8x8xbf16>
    %32 = arith.truncf %17 : vector<8x4xf32> to vector<8x4xbf16>
    %cst_22 = arith.constant dense<0.000000e+00> : vector<8x4xf32>
    %33 = tpu.matmul %31, %32, %cst_22 {dimension_numbers = #tpu.dot_dimension_numbers<[1], [0], [0], [1], [0, 0, 1, 1], [], []>} : vector<8x8xbf16>, vector<8x4xbf16>, vector<8x4xf32> -> vector<8x4xf32>
    %c0_23 = arith.constant 0 : index
    %c0_24 = arith.constant 0 : index
    %34 = vector.load %arg14[%c0_23, %c0_24] : memref<8x32xf32, #tpu.memory_space<vmem>>, vector<8x32xf32>
    %35 = arith.truncf %33 : vector<8x4xf32> to vector<8x4xbf16>
    %cst_25 = arith.constant dense<0.000000e+00> : vector<8x32xf32>
    %36 = tpu.matmul %35, %10, %cst_25 {dimension_numbers = #tpu.dot_dimension_numbers<[1], [0], [0], [1], [0, 0, 1, 1], [], []>} : vector<8x4xbf16>, vector<4x32xbf16>, vector<8x32xf32> -> vector<8x32xf32>
    %37 = arith.addf %34, %36 : vector<8x32xf32>
    %c0_26 = arith.constant 0 : index
    %c0_27 = arith.constant 0 : index
    %38 = vector.load %arg14[%c0_26, %c0_27] : memref<8x32xf32, #tpu.memory_space<vmem>>, vector<8x32xf32>
    tpu.vector_store %arg14[%c0_26, %c0_27], %37 {strides = array<i32>} : memref<8x32xf32, #tpu.memory_space<vmem>>, vector<8x32xf32>,
    %c7_i32 = arith.constant 7 : i32
    %39 = arith.cmpi eq, %arg2, %c7_i32 : i32
    %40 = arith.extui %39 : i1 to i32
    %c0_i32_28 = arith.constant 0 : i32
    %41 = arith.cmpi ne, %40, %c0_i32_28 : i32
    scf.if %41 {
      %c0_29 = arith.constant 0 : index
      %c0_30 = arith.constant 0 : index
      %42 = vector.load %arg14[%c0_29, %c0_30] : memref<8x32xf32, #tpu.memory_space<vmem>>, vector<8x32xf32>
      %c0_31 = arith.constant 0 : index
      %c0_32 = arith.constant 0 : index
      %c0_33 = arith.constant 0 : index
      %43 = vector.load %arg11[%c0_31, %c0_32, %c0_33] : memref<1x8x32xf32, #tpu.memory_space<vmem>>, vector<1x8x32xf32>
      %44 = vector.shape_cast %43 : vector<1x8x32xf32> to vector<8x32xf32>
      %45 = vector.shape_cast %42 : vector<8x32xf32> to vector<1x8x32xf32>
      tpu.vector_store %arg11[%c0_31, %c0_32, %c0_33], %45 {strides = array<i32>} : memref<1x8x32xf32, #tpu.memory_space<vmem>>, vector<1x8x32xf32>,
    } else {
    }
    return
  }
  func.func @transform_0(%arg0: i32, %arg1: i32, %arg2: i32) -> (i32, i32, i32) {
    %c0_i32 = arith.constant 0 : i32
    %c0_i32_0 = arith.constant 0 : i32
    return %arg0, %arg1, %c0_i32 : i32, i32, i32
  }
  func.func @transform_1(%arg0: i32, %arg1: i32, %arg2: i32) -> (i32, i32, i32) {
    %c0_i32 = arith.constant 0 : i32
    %c0_i32_0 = arith.constant 0 : i32
    %c0_i32_1 = arith.constant 0 : i32
    return %arg0, %c0_i32, %c0_i32_0 : i32, i32, i32
  }
  func.func @transform_2(%arg0: i32, %arg1: i32, %arg2: i32) -> (i32, i32) {
    %c0_i32 = arith.constant 0 : i32
    %c0_i32_0 = arith.constant 0 : i32
    %c0_i32_1 = arith.constant 0 : i32
    return %c0_i32, %c0_i32_0 : i32, i32
  }
  func.func @transform_3(%arg0: i32, %arg1: i32, %arg2: i32) -> (i32, i32) {
    %c0_i32 = arith.constant 0 : i32
    %c0_i32_0 = arith.constant 0 : i32
    %c0_i32_1 = arith.constant 0 : i32
    return %c0_i32, %c0_i32_0 : i32, i32
  }
  func.func @transform_4(%arg0: i32, %arg1: i32, %arg2: i32) -> (i32, i32, i32) {
    %c0_i32 = arith.constant 0 : i32
    %c0_i32_0 = arith.constant 0 : i32
    %c0_i32_1 = arith.constant 0 : i32
    return %arg2, %c0_i32, %c0_i32_0 : i32, i32, i32
  }
  func.func @transform_5(%arg0: i32, %arg1: i32, %arg2: i32) -> (i32, i32, i32) {
    %c0_i32 = arith.constant 0 : i32
    %c0_i32_0 = arith.constant 0 : i32
    %c0_i32_1 = arith.constant 0 : i32
    return %arg2, %c0_i32, %c0_i32_0 : i32, i32, i32
  }
  func.func @transform_6(%arg0: i32, %arg1: i32, %arg2: i32) -> (i32, i32, i32) {
    %c0_i32 = arith.constant 0 : i32
    %c0_i32_0 = arith.constant 0 : i32
    %c0_i32_1 = arith.constant 0 : i32
    return %arg2, %c0_i32, %c0_i32_0 : i32, i32, i32
  }
  func.func @transform_7(%arg0: i32, %arg1: i32, %arg2: i32) -> (i32, i32, i32) {
    %c0_i32 = arith.constant 0 : i32
    %c0_i32_0 = arith.constant 0 : i32
    %c0_i32_1 = arith.constant 0 : i32
    return %arg2, %c0_i32, %c0_i32_0 : i32, i32, i32
  }
  func.func @transform_8(%arg0: i32, %arg1: i32, %arg2: i32) -> (i32, i32, i32) {
    %c0_i32 = arith.constant 0 : i32
    %c0_i32_0 = arith.constant 0 : i32
    return %arg0, %arg1, %c0_i32 : i32, i32, i32
  }
}

</mosaic_0001>

<llo_original>
// kernel: tpu_custom_call.1
$region0: #{tpu_custom_call.1}
  #allocation0 [shape = 'u32[]', space=smem, size = 0x4, offset = 0x4, fixed_abs, tag = 'smem constant byte address 0x4 - core index']
  #allocation1 [shape = 'u32[144,128]{1,0:T(1,128)}', space=vmem, size = 0x12000, scoped, tag = 'internal scratch']
  #allocation2 [shape = 'bf16[8,32]{1,0:T(8,128)(2,1)}', space=vmem, size = 0x800, scoped, tag = 'scratch operand']
  #allocation3 [shape = 'bf16[8,32]{1,0:T(8,128)(2,1)}', space=vmem, size = 0x800, scoped, tag = 'scratch operand']
  #allocation4 [shape = 'f32[8,32]{1,0:T(8,128)}', space=vmem, size = 0x1000, scoped, tag = 'scratch operand']
  %s0 = inlined_call_operand.vmem [shape: f32[2,8,32], index: 0, kind: input, shape index: {}]
  %s1 = inlined_call_operand.vmem [shape: f32[2,8,32], index: 1, kind: input, shape index: {}]
  %s2 = inlined_call_operand.vmem [shape: f32[1,32], index: 2, kind: input, shape index: {}]
  %s3 = inlined_call_operand.vmem [shape: f32[1,32], index: 3, kind: input, shape index: {}]
  %s4 = inlined_call_operand.vmem [shape: bf16[8,32,4], index: 4, kind: input, shape index: {}]
  %s5 = inlined_call_operand.vmem [shape: bf16[8,32,4], index: 5, kind: input, shape index: {}]
  %s6 = inlined_call_operand.vmem [shape: bf16[8,32,4], index: 6, kind: input, shape index: {}]
  %s7 = inlined_call_operand.vmem [shape: bf16[8,4,32], index: 7, kind: input, shape index: {}]
  %s8 = inlined_call_operand.hbm [shape: f32[2,8,32], index: 8, kind: output, shape index: {}]
  %s9 = sld [smem:[#allocation0]]
  $region73: #{tpu_custom_call.1} parent=0
    _
  %s11 = ssub.s32 1, %s9
  %s12 = scalar_select 0, %s11, %s9
  $region1: #{tpu_custom_call.1} parent=0
    #allocation5 [shape = 'u8[8192]{0}', space=vmem, size = 0x2000, scoped, tag = 'output window, operand 0']
    #allocation6 [shape = 's32[2]{0}', space=sflag, size = 0x8, scoped, tag = 'scoped memory for tpu_custom_call.1']
    %13 = vsyncpa [#allocation6], 0
    %s14 = scalar_lea.sflag [#allocation6], 1
    %15 = vsyncpa %s14, 0
    loop: start=0, step=1, limit=18
    $region2: #{tpu_custom_call.1} parent=1 // loop_pre_header
      _
    $region3: #{tpu_custom_call.1} parent=1 // loop_header
      %s17 = sphi 0, %s21
      %p18 = scmp.ge.s32.totalorder %s17, 18
      %s24 = sphi 0, %s43
      %s25 = sphi 0, %s39
      %s26 = sphi 0, %s35
      %s27 = sphi 0, %s24
      %s28 = sphi 0, %s25
      %s29 = sphi 0, %s26
      %s30 = sphi 0, %s27
      %s31 = sphi 0, %s28
      %s32 = sphi 0, %s29
      %s48 = sphi 0, %s50
      %s51 = sphi 0, %s48
      %s52 = sphi 0, %s51
      %s68 = sphi 0, %s52
      %s74 = sphi 0, %s76
      %s77 = sphi 0, %s74
      %s78 = sphi 0, %s77
      %s94 = sphi 0, %s78
      %s98 = sphi 0, %s98
      %s100 = sphi 0, %s98
      %s101 = sphi 0, %s100
      %s115 = sphi 0, %s101
      %s119 = sphi 0, %s119
      %s121 = sphi 0, %s119
      %s122 = sphi 0, %s121
      %s136 = sphi 0, %s122
      %s142 = sphi 0, %s144
      %s145 = sphi 0, %s142
      %s146 = sphi 0, %s145
      %s162 = sphi 0, %s146
      %s168 = sphi 0, %s170
      %s171 = sphi 0, %s168
      %s172 = sphi 0, %s171
      %s188 = sphi 0, %s172
      %s194 = sphi 0, %s196
      %s197 = sphi 0, %s194
      %s198 = sphi 0, %s197
      %s214 = sphi 0, %s198
      %s220 = sphi 0, %s222
      %s223 = sphi 0, %s220
      %s224 = sphi 0, %s223
      %s240 = sphi 0, %s224
      %s248 = sphi 0, %s250
      %s251 = sphi 0, %s248
      %s252 = sphi 0, %s251
      %s268 = sphi 0, %s252
    $region4: #{tpu_custom_call.1} parent=1 // loop_header_branch
      %20 = sbr.rel (%p18) target = $region8
    $region5: #{tpu_custom_call.1} parent=1 // loop_body
      %s22 = ssub.s32 %s17, 1
      %s23 = ssub.s32 %s17, 2
      %s33 = sadd.s32 1, %s26
      %p34 = scmp.ge.s32.totalorder %s33, 8
      %s35 = scalar_select %p34, 0, %s33
      %s36 = sadd.s32 1, %s25
      %s37 = scalar_select %p34, %s36, %s25
      %p38 = scmp.ge.s32.totalorder %s37, 1
      %s39 = scalar_select %p38, 0, %s37
      %s40 = sadd.s32 1, %s24
      %s41 = scalar_select %p38, %s40, %s24
      %p42 = scmp.ge.s32.totalorder %s41, 2
      %s43 = scalar_select %p42, 0, %s41
      %s44 = ssub.s32 %s24, %s43
      %s45 = ssub.s32 %s25, %s39
      %s46 = sor.u32 %s44, %s45
      %p47 = scmp.eq.s32.totalorder %s46, 0
      %s49 = sadd.s32 %s48, 1
      %s50 = scalar_select %p47, %s48, %s49
      %p53 = pneg %p47
      %p54 = scmp.eq.s32.totalorder %s17, 15
      %p55 = por %p53, %p54
      %p56 = scmp.ne.s32.totalorder %s48, %s51
      %p57 = scmp.eq.s32.totalorder %s17, 0
      %p58 = por %p56, %p57
      %p59 = scmp.ne.s32.totalorder %s48, %s51
      %p60 = scmp.eq.s32.totalorder %s22, 15
      %p61 = por %p59, %p60
      %p62 = scmp.ne.s32.totalorder %s51, %s52
      %p63 = scmp.eq.s32.totalorder %s22, 0
      %p64 = por %p62, %p63
      %p65 = scmp.ne.s32.totalorder %s51, %s52
      %p66 = scmp.eq.s32.totalorder %s23, 15
      %p67 = por %p65, %p66
      %p69 = scmp.ne.s32.totalorder %s52, %s68
      %p70 = scmp.eq.s32.totalorder %s23, 0
      %p71 = por %p69, %p70
      %s72 = ssub.s32 %s24, %s43
      %p73 = scmp.eq.s32.totalorder %s72, 0
      %s75 = sadd.s32 %s74, 1
      %s76 = scalar_select %p73, %s74, %s75
      %p79 = pneg %p73
      %p80 = scmp.eq.s32.totalorder %s17, 15
      %p81 = por %p79, %p80
      %p82 = scmp.ne.s32.totalorder %s74, %s77
      %p83 = scmp.eq.s32.totalorder %s17, 0
      %p84 = por %p82, %p83
      %p85 = scmp.ne.s32.totalorder %s74, %s77
      %p86 = scmp.eq.s32.totalorder %s22, 15
      %p87 = por %p85, %p86
      %p88 = scmp.ne.s32.totalorder %s77, %s78
      %p89 = scmp.eq.s32.totalorder %s22, 0
      %p90 = por %p88, %p89
      %p91 = scmp.ne.s32.totalorder %s77, %s78
      %p92 = scmp.eq.s32.totalorder %s23, 15
      %p93 = por %p91, %p92
      %p95 = scmp.ne.s32.totalorder %s78, %s94
      %p96 = scmp.eq.s32.totalorder %s23, 0
      %p97 = por %p95, %p96
      %s99 = sadd.s32 %s98, 1
      %p102 = scmp.eq.s32.totalorder %s17, 15
      %p103 = scmp.ne.s32.totalorder %s98, %s100
      %p104 = scmp.eq.s32.totalorder %s17, 0
      %p105 = por %p103, %p104
      %p106 = scmp.ne.s32.totalorder %s98, %s100
      %p107 = scmp.eq.s32.totalorder %s22, 15
      %p108 = por %p106, %p107
      %p109 = scmp.ne.s32.totalorder %s100, %s101
      %p110 = scmp.eq.s32.totalorder %s22, 0
      %p111 = por %p109, %p110
      %p112 = scmp.ne.s32.totalorder %s100, %s101
      %p113 = scmp.eq.s32.totalorder %s23, 15
      %p114 = por %p112, %p113
      %p116 = scmp.ne.s32.totalorder %s101, %s115
      %p117 = scmp.eq.s32.totalorder %s23, 0
      %p118 = por %p116, %p117
      %s120 = sadd.s32 %s119, 1
      %p123 = scmp.eq.s32.totalorder %s17, 15
      %p124 = scmp.ne.s32.totalorder %s119, %s121
      %p125 = scmp.eq.s32.totalorder %s17, 0
      %p126 = por %p124, %p125
      %p127 = scmp.ne.s32.totalorder %s119, %s121
      %p128 = scmp.eq.s32.totalorder %s22, 15
      %p129 = por %p127, %p128
      %p130 = scmp.ne.s32.totalorder %s121, %s122
      %p131 = scmp.eq.s32.totalorder %s22, 0
      %p132 = por %p130, %p131
      %p133 = scmp.ne.s32.totalorder %s121, %s122
      %p134 = scmp.eq.s32.totalorder %s23, 15
      %p135 = por %p133, %p134
      %p137 = scmp.ne.s32.totalorder %s122, %s136
      %p138 = scmp.eq.s32.totalorder %s23, 0
      %p139 = por %p137, %p138
      %s140 = ssub.s32 %s26, %s35
      %p141 = scmp.eq.s32.totalorder %s140, 0
      %s143 = sadd.s32 %s142, 1
      %s144 = scalar_select %p141, %s142, %s143
      %p147 = pneg %p141
      %p148 = scmp.eq.s32.totalorder %s17, 15
      %p149 = por %p147, %p148
      %p150 = scmp.ne.s32.totalorder %s142, %s145
      %p151 = scmp.eq.s32.totalorder %s17, 0
      %p152 = por %p150, %p151
      %p153 = scmp.ne.s32.totalorder %s142, %s145
      %p154 = scmp.eq.s32.totalorder %s22, 15
      %p155 = por %p153, %p154
      %p156 = scmp.ne.s32.totalorder %s145, %s146
      %p157 = scmp.eq.s32.totalorder %s22, 0
      %p158 = por %p156, %p157
      %p159 = scmp.ne.s32.totalorder %s145, %s146
      %p160 = scmp.eq.s32.totalorder %s23, 15
      %p161 = por %p159, %p160
      %p163 = scmp.ne.s32.totalorder %s146, %s162
      %p164 = scmp.eq.s32.totalorder %s23, 0
      %p165 = por %p163, %p164
      %s166 = ssub.s32 %s26, %s35
      %p167 = scmp.eq.s32.totalorder %s166, 0
      %s169 = sadd.s32 %s168, 1
      %s170 = scalar_select %p167, %s168, %s169
      %p173 = pneg %p167
      %p174 = scmp.eq.s32.totalorder %s17, 15
      %p175 = por %p173, %p174
      %p176 = scmp.ne.s32.totalorder %s168, %s171
      %p177 = scmp.eq.s32.totalorder %s17, 0
      %p178 = por %p176, %p177
      %p179 = scmp.ne.s32.totalorder %s168, %s171
      %p180 = scmp.eq.s32.totalorder %s22, 15
      %p181 = por %p179, %p180
      %p182 = scmp.ne.s32.totalorder %s171, %s172
      %p183 = scmp.eq.s32.totalorder %s22, 0
      %p184 = por %p182, %p183
      %p185 = scmp.ne.s32.totalorder %s171, %s172
      %p186 = scmp.eq.s32.totalorder %s23, 15
      %p187 = por %p185, %p186
      %p189 = scmp.ne.s32.totalorder %s172, %s188
      %p190 = scmp.eq.s32.totalorder %s23, 0
      %p191 = por %p189, %p190
      %s192 = ssub.s32 %s26, %s35
      %p193 = scmp.eq.s32.totalorder %s192, 0
      %s195 = sadd.s32 %s194, 1
      %s196 = scalar_select %p193, %s194, %s195
      %p199 = pneg %p193
      %p200 = scmp.eq.s32.totalorder %s17, 15
      %p201 = por %p199, %p200
      %p202 = scmp.ne.s32.totalorder %s194, %s197
      %p203 = scmp.eq.s32.totalorder %s17, 0
      %p204 = por %p202, %p203
      %p205 = scmp.ne.s32.totalorder %s194, %s197
      %p206 = scmp.eq.s32.totalorder %s22, 15
      %p207 = por %p205, %p206
      %p208 = scmp.ne.s32.totalorder %s197, %s198
      %p209 = scmp.eq.s32.totalorder %s22, 0
      %p210 = por %p208, %p209
      %p211 = scmp.ne.s32.totalorder %s197, %s198
      %p212 = scmp.eq.s32.totalorder %s23, 15
      %p213 = por %p211, %p212
      %p215 = scmp.ne.s32.totalorder %s198, %s214
      %p216 = scmp.eq.s32.totalorder %s23, 0
      %p217 = por %p215, %p216
      %s218 = ssub.s32 %s26, %s35
      %p219 = scmp.eq.s32.totalorder %s218, 0
      %s221 = sadd.s32 %s220, 1
      %s222 = scalar_select %p219, %s220, %s221
      %p225 = pneg %p219
      %p226 = scmp.eq.s32.totalorder %s17, 15
      %p227 = por %p225, %p226
      %p228 = scmp.ne.s32.totalorder %s220, %s223
      %p229 = scmp.eq.s32.totalorder %s17, 0
      %p230 = por %p228, %p229
      %p231 = scmp.ne.s32.totalorder %s220, %s223
      %p232 = scmp.eq.s32.totalorder %s22, 15
      %p233 = por %p231, %p232
      %p234 = scmp.ne.s32.totalorder %s223, %s224
      %p235 = scmp.eq.s32.totalorder %s22, 0
      %p236 = por %p234, %p235
      %p237 = scmp.ne.s32.totalorder %s223, %s224
      %p238 = scmp.eq.s32.totalorder %s23, 15
      %p239 = por %p237, %p238
      %p241 = scmp.ne.s32.totalorder %s224, %s240
      %p242 = scmp.eq.s32.totalorder %s23, 0
      %p243 = por %p241, %p242
      %s244 = ssub.s32 %s24, %s43
      %s245 = ssub.s32 %s25, %s39
      %s246 = sor.u32 %s244, %s245
      %p247 = scmp.eq.s32.totalorder %s246, 0
      %s249 = sadd.s32 %s248, 1
      %s250 = scalar_select %p247, %s248, %s249
      %p253 = pneg %p247
      %p254 = scmp.eq.s32.totalorder %s17, 15
      %p255 = por %p253, %p254
      %p256 = scmp.ne.s32.totalorder %s248, %s251
      %p257 = scmp.eq.s32.totalorder %s17, 0
      %p258 = por %p256, %p257
      %p259 = scmp.ne.s32.totalorder %s248, %s251
      %p260 = scmp.eq.s32.totalorder %s22, 15
      %p261 = por %p259, %p260
      %p262 = scmp.ne.s32.totalorder %s251, %s252
      %p263 = scmp.eq.s32.totalorder %s22, 0
      %p264 = por %p262, %p263
      %p265 = scmp.ne.s32.totalorder %s251, %s252
      %p266 = scmp.eq.s32.totalorder %s23, 15
      %p267 = por %p265, %p266
      %p269 = scmp.ne.s32.totalorder %s252, %s268
      %p270 = scmp.eq.s32.totalorder %s23, 0
      %p271 = por %p269, %p270
      %p272 = scmp.le.s32.totalorder 1, %s17
      %p273 = scmp.lt.s32.totalorder %s17, 17
      %p274 = pnand %p272, %p273
      %p275 = pneg %p274
      // Predicated region
      $region9: #{tpu_custom_call.1} parent=5 // pred_check
        _
      $region10: #{tpu_custom_call.1} parent=5 // pred_check_branch
        %277 = sbr.rel (%p274) target = $region12
      $region11: #{tpu_custom_call.1} parent=5 // pred_region
        %s278 = ssub.s32 %s17, 1
        // Predicated region
        $region13: #{tpu_custom_call.1} parent=11 // pred_check
          %p279 = pneg %p111
        $region14: #{tpu_custom_call.1} parent=11 // pred_check_branch
          %281 = sbr.rel (%p279) target = $region16
        $region15: #{tpu_custom_call.1} parent=11 // pred_region
          _
        $region16: #{tpu_custom_call.1} parent=11 // pred_fallthru
          _
        // Predicated region
        $region17: #{tpu_custom_call.1} parent=11 // pred_check
          %p282 = pneg %p132
        $region18: #{tpu_custom_call.1} parent=11 // pred_check_branch
          %284 = sbr.rel (%p282) target = $region20
        $region19: #{tpu_custom_call.1} parent=11 // pred_region
          _
        $region20: #{tpu_custom_call.1} parent=11 // pred_fallthru
          _
      $region12: #{tpu_custom_call.1} parent=5 // pred_fallthru
        _
      %p285 = scmp.lt.s32.totalorder %s17, 16
      // Predicated region
      $region21: #{tpu_custom_call.1} parent=5 // pred_check
        %p286 = pneg %p285
      $region22: #{tpu_custom_call.1} parent=5 // pred_check_branch
        %288 = sbr.rel (%p286) target = $region24
      $region23: #{tpu_custom_call.1} parent=5 // pred_region
        // Predicated region
        $region25: #{tpu_custom_call.1} parent=23 // pred_check
          %p289 = pneg %p58
        $region26: #{tpu_custom_call.1} parent=23 // pred_check_branch
          %291 = sbr.rel (%p289) target = $region28
        $region27: #{tpu_custom_call.1} parent=23 // pred_region
          %p292 = scmp.lt.s32.totalorder %s24, 1
          %s293 = scalar_select %p292, %s24, 1
          %p294 = scmp.lt.s32.totalorder %s25, 0
          %s295 = scalar_select %p294, %s25, 0
          %s296 = sadd.s32 %s295, %s293
          %s297 = smul.addr %s296, 8
          %s298 = scalar_lea.vmem %s0, %s297
        $region28: #{tpu_custom_call.1} parent=23 // pred_fallthru
          _
        // Predicated region
        $region29: #{tpu_custom_call.1} parent=23 // pred_check
          %p299 = pneg %p84
        $region30: #{tpu_custom_call.1} parent=23 // pred_check_branch
          %301 = sbr.rel (%p299) target = $region32
        $region31: #{tpu_custom_call.1} parent=23 // pred_region
          %p302 = scmp.lt.s32.totalorder %s24, 1
          %s303 = scalar_select %p302, %s24, 1
          %s304 = smul.addr %s303, 8
          %s305 = scalar_lea.vmem %s1, %s304
        $region32: #{tpu_custom_call.1} parent=23 // pred_fallthru
          _
        // Predicated region
        $region33: #{tpu_custom_call.1} parent=23 // pred_check
          %p306 = pneg %p152
        $region34: #{tpu_custom_call.1} parent=23 // pred_check_branch
          %308 = sbr.rel (%p306) target = $region36
        $region35: #{tpu_custom_call.1} parent=23 // pred_region
          %p309 = scmp.lt.s32.totalorder %s26, 7
          %s310 = scalar_select %p309, %s26, 7
          %s311 = smul.addr %s310, 4
          %s312 = smul.addr %s311, 4
          %s313 = scalar_lea.vmem %s4, %s312
        $region36: #{tpu_custom_call.1} parent=23 // pred_fallthru
          _
        // Predicated region
        $region37: #{tpu_custom_call.1} parent=23 // pred_check
          %p314 = pneg %p178
        $region38: #{tpu_custom_call.1} parent=23 // pred_check_branch
          %316 = sbr.rel (%p314) target = $region40
        $region39: #{tpu_custom_call.1} parent=23 // pred_region
          %p317 = scmp.lt.s32.totalorder %s26, 7
          %s318 = scalar_select %p317, %s26, 7
          %s319 = smul.addr %s318, 4
          %s320 = smul.addr %s319, 4
          %s321 = scalar_lea.vmem %s5, %s320
        $region40: #{tpu_custom_call.1} parent=23 // pred_fallthru
          _
        // Predicated region
        $region41: #{tpu_custom_call.1} parent=23 // pred_check
          %p322 = pneg %p204
        $region42: #{tpu_custom_call.1} parent=23 // pred_check_branch
          %324 = sbr.rel (%p322) target = $region44
        $region43: #{tpu_custom_call.1} parent=23 // pred_region
          %p325 = scmp.lt.s32.totalorder %s26, 7
          %s326 = scalar_select %p325, %s26, 7
          %s327 = smul.addr %s326, 4
          %s328 = smul.addr %s327, 4
          %s329 = scalar_lea.vmem %s6, %s328
        $region44: #{tpu_custom_call.1} parent=23 // pred_fallthru
          _
        // Predicated region
        $region45: #{tpu_custom_call.1} parent=23 // pred_check
          %p330 = pneg %p230
        $region46: #{tpu_custom_call.1} parent=23 // pred_check_branch
          %332 = sbr.rel (%p330) target = $region48
        $region47: #{tpu_custom_call.1} parent=23 // pred_region
          %p333 = scmp.lt.s32.totalorder %s26, 7
          %s334 = scalar_select %p333, %s26, 7
          %s335 = smul.addr %s334, 2
          %s336 = scalar_lea.vmem %s7, %s335
        $region48: #{tpu_custom_call.1} parent=23 // pred_fallthru
          _
      $region24: #{tpu_custom_call.1} parent=5 // pred_fallthru
        _
      %p337 = scmp.le.s32.totalorder 1, %s17
      %p338 = scmp.lt.s32.totalorder %s17, 17
      %p339 = pnand %p337, %p338
      %p340 = pneg %p339
      // Predicated region
      $region49: #{tpu_custom_call.1} parent=5 // pred_check
        _
      $region50: #{tpu_custom_call.1} parent=5 // pred_check_branch
        %342 = sbr.rel (%p339) target = $region52
      $region51: #{tpu_custom_call.1} parent=5 // pred_region
        %s343 = ssub.s32 %s17, 1
        %p344 = scmp.lt.s32.totalorder %s27, 1
        %s345 = scalar_select %p344, %s27, 1
        %p346 = scmp.lt.s32.totalorder %s28, 0
        %s347 = scalar_select %p346, %s28, 0
        %s348 = sadd.s32 %s347, %s345
        %s349 = smul.addr %s348, 8
        %s350 = scalar_lea.vmem %s0, %s349
        %p351 = pneg %p64
        %p352 = pneg %p61
        %p353 = scmp.lt.s32.totalorder %s27, 1
        %s354 = scalar_select %p353, %s27, 1
        %s355 = smul.addr %s354, 8
        %s356 = scalar_lea.vmem %s1, %s355
        %p357 = pneg %p90
        %p358 = pneg %p87
        %p359 = pneg %p111
        %p360 = pneg %p108
        %p361 = pneg %p132
        %p362 = pneg %p129
        %p363 = scmp.lt.s32.totalorder %s29, 7
        %s364 = scalar_select %p363, %s29, 7
        %s365 = smul.addr %s364, 4
        %s366 = smul.addr %s365, 4
        %s367 = scalar_lea.vmem %s4, %s366
        %p368 = pneg %p158
        %p369 = pneg %p155
        %p370 = scmp.lt.s32.totalorder %s29, 7
        %s371 = scalar_select %p370, %s29, 7
        %s372 = smul.addr %s371, 4
        %s373 = smul.addr %s372, 4
        %s374 = scalar_lea.vmem %s5, %s373
        %p375 = pneg %p184
        %p376 = pneg %p181
        %p377 = scmp.lt.s32.totalorder %s29, 7
        %s378 = scalar_select %p377, %s29, 7
        %s379 = smul.addr %s378, 4
        %s380 = smul.addr %s379, 4
        %s381 = scalar_lea.vmem %s6, %s380
        %p382 = pneg %p210
        %p383 = pneg %p207
        %p384 = scmp.lt.s32.totalorder %s29, 7
        %s385 = scalar_select %p384, %s29, 7
        %s386 = smul.addr %s385, 2
        %s387 = scalar_lea.vmem %s7, %s386
        %p388 = pneg %p236
        %p389 = pneg %p233
        %p390 = pneg %p264
        %p391 = pneg %p261
        %s392 = sand.u32 %s251, 1
        %s393 = scalar_lea.sflag [#allocation6], %s392
        %s394 = sand.u32 %s251, 1
        %s395 = smul.addr %s394, 8
        %s396 = scalar_lea.vmem [#allocation5], %s395
        %p397 = scmp.lt.s32.totalorder %s27, 1
        %s398 = scalar_select %p397, %s27, 1
        %p399 = scmp.lt.s32.totalorder %s28, 0
        %s400 = scalar_select %p399, %s28, 0
        %s401 = sadd.s32 %s400, %s398
        %s402 = smul.addr %s401, 8
        %s403 = scalar_lea.vmem %s0, %s402
        %p404 = scmp.lt.s32.totalorder %s27, 1
        %s405 = scalar_select %p404, %s27, 1
        %s406 = smul.addr %s405, 8
        %s407 = scalar_lea.vmem %s1, %s406
        %p408 = scmp.lt.s32.totalorder %s29, 7
        %s409 = scalar_select %p408, %s29, 7
        %s410 = smul.addr %s409, 4
        %s411 = smul.addr %s410, 4
        %s412 = scalar_lea.vmem %s4, %s411
        %p413 = scmp.lt.s32.totalorder %s29, 7
        %s414 = scalar_select %p413, %s29, 7
        %s415 = smul.addr %s414, 4
        %s416 = smul.addr %s415, 4
        %s417 = scalar_lea.vmem %s5, %s416
        %p418 = scmp.lt.s32.totalorder %s29, 7
        %s419 = scalar_select %p418, %s29, 7
        %s420 = smul.addr %s419, 4
        %s421 = smul.addr %s420, 4
        %s422 = scalar_lea.vmem %s6, %s421
        %p423 = scmp.lt.s32.totalorder %s29, 7
        %s424 = scalar_select %p423, %s29, 7
        %s425 = smul.addr %s424, 2
        %s426 = scalar_lea.vmem %s7, %s425
        %p428 = scmp.eq.s32.totalorder %s29, 0
        // Predicated region
        $region53: #{tpu_custom_call.1} parent=51 // pred_check
          %p429 = pneg %p428
        $region54: #{tpu_custom_call.1} parent=51 // pred_check_branch
          %431 = sbr.rel (%p429) target = $region56
        $region55: #{tpu_custom_call.1} parent=51 // pred_region
          %v432 = vld [vmem:[%s403] sm:$0xff]
          %v433 = vmul.f32 %v432, 2.0
          %vm434 = vcmask 261120
          %435 = vst.msk [vmem:[#allocation4] sm:$0xff] %vm434, %v433
          %v436 = vld [vmem:[%s2] sm:$0x1]
          %v437 = vld [vmem:[%s3] sm:$0x1]
          %v438 = vsel %vm434, %v433, 0.0
          %439 = vadd.xlane.f32.xlu0 %v438
          %v440 = vpop.xlane.xlu0 %439
          %v441 = vrcp.pop 32.0
          %v442 = vmul.f32 %v440, %v441
          %v443 = vsub.f32 %v433, %v442
          %v444 = vmul.f32 %v443, %v443
          %v445 = vsel %vm434, %v444, 0.0
          %446 = vadd.xlane.f32.xlu0 %v445
          %v447 = vpop.xlane.xlu0 %446
          %v448 = vmul.f32 %v447, %v441
          %v449 = vadd.f32 %v448, 1e-06
          %v450 = vrsqrt.pop %v449
          %v451 = vmul.f32 %v443, %v450
          %v453 = vlaneseq
          %v454 = vshrl.u32 %v453, 7
          %v455 = vsub.s32 0, %v454
          %v456 = vrot.slane %v436, %v455
          %v458 = vmul.f32 %v451, %v456
          %v460 = vlaneseq
          %v461 = vshrl.u32 %v460, 7
          %v462 = vsub.s32 0, %v461
          %v463 = vrot.slane %v437, %v462
          %v465 = vadd.f32 %v458, %v463
          %v466 = vpack.c.bf16 %v465, %v465
          %vm467 = vcmask 257024
          %468 = vst.msk [vmem:[#allocation2] sm:$0xf] %vm467, %v466
          %v469 = vld [vmem:[%s407] sm:$0xff]
          %v470 = vpack.c.bf16 %v469, %v469
          %471 = vst.msk [vmem:[#allocation3] sm:$0xf] %vm467, %v470
        $region56: #{tpu_custom_call.1} parent=51 // pred_fallthru
          _
        %v472 = vld [vmem:[%s412] sm:$0xf]
        %v473 = vld [vmem:[%s412 + $0x4] sm:$0xf]
        %v474 = vld [vmem:[%s412 + $0x8] sm:$0xf]
        %v475 = vld [vmem:[%s412 + $0xc] sm:$0xf]
        %v476 = vld [vmem:[%s417] sm:$0xf]
        %v477 = vld [vmem:[%s417 + $0x4] sm:$0xf]
        %v478 = vld [vmem:[%s417 + $0x8] sm:$0xf]
        %v479 = vld [vmem:[%s417 + $0xc] sm:$0xf]
        %v480 = vld [vmem:[%s422] sm:$0xf]
        %v481 = vld [vmem:[%s422 + $0x4] sm:$0xf]
        %v482 = vld [vmem:[%s422 + $0x8] sm:$0xf]
        %v483 = vld [vmem:[%s422 + $0xc] sm:$0xf]
        %v484 = vld [vmem:[%s426] sm:$0x3]
        %v485 = vld [vmem:[#allocation2] sm:$0xf]
        %v486 = vld [vmem:[#allocation3] sm:$0xf]
        %v491 = vunpack.c.l.b16 %v472
        %v492 = vunpack.c.l.b16 %v473
        %v493 = vunpack.c.l.b16 %v474
        %v494 = vunpack.c.l.b16 %v475
        %v495 = vpack.c.b16 %v492, %v491
        %v496 = vpack.c.b16 %v494, %v493
        %vm499 = vcmask 261120
        %v501 = vsel %vm499, %v485, 0
        %503 = vmatprep.subr.bf16.mxu0 0
        %504 = vmatpush1.bf16.msra.mxu0 %v495
        %505 = vmatprep.subr.bf16.mxu0 0
        %506 = vmatpush1.bf16.msra.mxu0 %v496
        %507 = vmatprep.subr.bf16.mxu0 0
        %508 = vmatpush1.bf16.msra.mxu0 0
        %509 = vmatprep.subr.bf16.mxu0 0
        %510 = vmatpush1.bf16.msra.mxu0 0
        %511 = vmatprep.subr.bf16.mxu0 0
        %512 = vmatpush1.bf16.msra.mxu0 0
        %513 = vmatprep.subr.bf16.mxu0 0
        %514 = vmatpush1.bf16.msra.mxu0 0
        %515 = vmatprep.subr.bf16.mxu0 0
        %516 = vmatpush1.bf16.msra.mxu0 0
        %517 = vmatprep.subr.bf16.mxu0 0
        %518 = vmatpush1.bf16.msra.mxu0 0
        %519 = vmatprep.subr.bf16.mxu0 0
        %520 = vmatpush1.bf16.msra.mxu0 0
        %521 = vmatprep.subr.bf16.mxu0 0
        %522 = vmatpush1.bf16.msra.mxu0 0
        %523 = vmatprep.subr.bf16.mxu0 0
        %524 = vmatpush1.bf16.msra.mxu0 0
        %525 = vmatprep.subr.bf16.mxu0 0
        %526 = vmatpush1.bf16.msra.mxu0 0
        %527 = vmatprep.subr.bf16.mxu0 0
        %528 = vmatpush1.bf16.msra.mxu0 0
        %529 = vmatprep.subr.bf16.mxu0 0
        %530 = vmatpush1.bf16.msra.mxu0 0
        %531 = vmatprep.subr.bf16.mxu0 0
        %532 = vmatpush1.bf16.msra.mxu0 0
        %533 = vmatprep.subr.bf16.mxu0 0
        %534 = vmatpush1.bf16.msra.mxu0 0
        %535 = vmatprep.mubr.bf16.mxu0 0
        %536 = vmatmul.mubr.bf16.gmra.mrb[0].mxu0 %v501
        %v537 = vpop.f32.mrb[0].mxu0
        %v538 = vadd.f32 0.0, %v537
        %v539 = vpop.f32.mrb[0].mxu0
        %v540 = vpop.f32.mrb[0].mxu0
        %v541 = vpop.f32.mrb[0].mxu0
        %542 = vdwg.mxu0
        %v543 = vmul.f32 %v538, 0.5
        %v548 = vunpack.c.l.b16 %v476
        %v549 = vunpack.c.l.b16 %v477
        %v550 = vunpack.c.l.b16 %v478
        %v551 = vunpack.c.l.b16 %v479
        %v552 = vpack.c.b16 %v549, %v548
        %v553 = vpack.c.b16 %v551, %v550
        %v557 = vsel %vm499, %v486, 0
        %559 = vmatprep.subr.bf16.mxu0 0
        %560 = vmatpush1.bf16.msra.mxu0 %v552
        %561 = vmatprep.subr.bf16.mxu0 0
        %562 = vmatpush1.bf16.msra.mxu0 %v553
        %563 = vmatprep.subr.bf16.mxu0 0
        %564 = vmatpush1.bf16.msra.mxu0 0
        %565 = vmatprep.subr.bf16.mxu0 0
        %566 = vmatpush1.bf16.msra.mxu0 0
        %567 = vmatprep.subr.bf16.mxu0 0
        %568 = vmatpush1.bf16.msra.mxu0 0
        %569 = vmatprep.subr.bf16.mxu0 0
        %570 = vmatpush1.bf16.msra.mxu0 0
        %571 = vmatprep.subr.bf16.mxu0 0
        %572 = vmatpush1.bf16.msra.mxu0 0
        %573 = vmatprep.subr.bf16.mxu0 0
        %574 = vmatpush1.bf16.msra.mxu0 0
        %575 = vmatprep.subr.bf16.mxu0 0
        %576 = vmatpush1.bf16.msra.mxu0 0
        %577 = vmatprep.subr.bf16.mxu0 0
        %578 = vmatpush1.bf16.msra.mxu0 0
        %579 = vmatprep.subr.bf16.mxu0 0
        %580 = vmatpush1.bf16.msra.mxu0 0
        %581 = vmatprep.subr.bf16.mxu0 0
        %582 = vmatpush1.bf16.msra.mxu0 0
        %583 = vmatprep.subr.bf16.mxu0 0
        %584 = vmatpush1.bf16.msra.mxu0 0
        %585 = vmatprep.subr.bf16.mxu0 0
        %586 = vmatpush1.bf16.msra.mxu0 0
        %587 = vmatprep.subr.bf16.mxu0 0
        %588 = vmatpush1.bf16.msra.mxu0 0
        %589 = vmatprep.subr.bf16.mxu0 0
        %590 = vmatpush1.bf16.msra.mxu0 0
        %591 = vmatprep.mubr.bf16.mxu0 0
        %592 = vmatmul.mubr.bf16.gmra.mrb[0].mxu0 %v557
        %v593 = vpop.f32.mrb[0].mxu0
        %v594 = vadd.f32 0.0, %v593
        %v595 = vpop.f32.mrb[0].mxu0
        %v596 = vpop.f32.mrb[0].mxu0
        %v597 = vpop.f32.mrb[0].mxu0
        %598 = vdwg.mxu0
        %v603 = vunpack.c.l.b16 %v480
        %v604 = vunpack.c.l.b16 %v481
        %v605 = vunpack.c.l.b16 %v482
        %v606 = vunpack.c.l.b16 %v483
        %v607 = vpack.c.b16 %v604, %v603
        %v608 = vpack.c.b16 %v606, %v605
        %611 = vmatprep.subr.bf16.mxu0 0
        %612 = vmatpush1.bf16.msra.mxu0 %v607
        %613 = vmatprep.subr.bf16.mxu0 0
        %614 = vmatpush1.bf16.msra.mxu0 %v608
        %615 = vmatprep.subr.bf16.mxu0 0
        %616 = vmatpush1.bf16.msra.mxu0 0
        %617 = vmatprep.subr.bf16.mxu0 0
        %618 = vmatpush1.bf16.msra.mxu0 0
        %619 = vmatprep.subr.bf16.mxu0 0
        %620 = vmatpush1.bf16.msra.mxu0 0
        %621 = vmatprep.subr.bf16.mxu0 0
        %622 = vmatpush1.bf16.msra.mxu0 0
        %623 = vmatprep.subr.bf16.mxu0 0
        %624 = vmatpush1.bf16.msra.mxu0 0
        %625 = vmatprep.subr.bf16.mxu0 0
        %626 = vmatpush1.bf16.msra.mxu0 0
        %627 = vmatprep.subr.bf16.mxu0 0
        %628 = vmatpush1.bf16.msra.mxu0 0
        %629 = vmatprep.subr.bf16.mxu0 0
        %630 = vmatpush1.bf16.msra.mxu0 0
        %631 = vmatprep.subr.bf16.mxu0 0
        %632 = vmatpush1.bf16.msra.mxu0 0
        %633 = vmatprep.subr.bf16.mxu0 0
        %634 = vmatpush1.bf16.msra.mxu0 0
        %635 = vmatprep.subr.bf16.mxu0 0
        %636 = vmatpush1.bf16.msra.mxu0 0
        %637 = vmatprep.subr.bf16.mxu0 0
        %638 = vmatpush1.bf16.msra.mxu0 0
        %639 = vmatprep.subr.bf16.mxu0 0
        %640 = vmatpush1.bf16.msra.mxu0 0
        %641 = vmatprep.subr.bf16.mxu0 0
        %642 = vmatpush1.bf16.msra.mxu0 0
        %643 = vmatprep.mubr.bf16.mxu0 0
        %644 = vmatmul.mubr.bf16.gmra.mrb[0].mxu0 %v557
        %v645 = vpop.f32.mrb[0].mxu0
        %v646 = vadd.f32 0.0, %v645
        %v647 = vpop.f32.mrb[0].mxu0
        %v648 = vpop.f32.mrb[0].mxu0
        %v649 = vpop.f32.mrb[0].mxu0
        %650 = vdwg.mxu0
        %v651 = vpack.c.bf16 %v543, %v543
        %v652 = vpack.c.bf16 %v594, %v594
        %vm653 = vcmask 31744
        %v655 = vsel %vm653, %v651, 0
        %v658 = vsel %vm653, %v652, 0
        %660 = vmatprep.subr.bf16.mxu0 0
        %661 = vmatpush1.bf16.xpose.msra.mxu0 %v658
        %662 = vmatprep.subr.bf16.mxu0 0
        %663 = vmatpush1.bf16.xpose.msra.mxu0 0
        %664 = vmatprep.subr.bf16.mxu0 0
        %665 = vmatpush1.bf16.xpose.msra.mxu0 0
        %666 = vmatprep.subr.bf16.mxu0 0
        %667 = vmatpush1.bf16.xpose.msra.mxu0 0
        %668 = vmatprep.subr.bf16.mxu0 0
        %669 = vmatpush1.bf16.xpose.msra.mxu0 0
        %670 = vmatprep.subr.bf16.mxu0 0
        %671 = vmatpush1.bf16.xpose.msra.mxu0 0
        %672 = vmatprep.subr.bf16.mxu0 0
        %673 = vmatpush1.bf16.xpose.msra.mxu0 0
        %674 = vmatprep.subr.bf16.mxu0 0
        %675 = vmatpush1.bf16.xpose.msra.mxu0 0
        %676 = vmatprep.subr.bf16.mxu0 0
        %677 = vmatpush1.bf16.xpose.msra.mxu0 0
        %678 = vmatprep.subr.bf16.mxu0 0
        %679 = vmatpush1.bf16.xpose.msra.mxu0 0
        %680 = vmatprep.subr.bf16.mxu0 0
        %681 = vmatpush1.bf16.xpose.msra.mxu0 0
        %682 = vmatprep.subr.bf16.mxu0 0
        %683 = vmatpush1.bf16.xpose.msra.mxu0 0
        %684 = vmatprep.subr.bf16.mxu0 0
        %685 = vmatpush1.bf16.xpose.msra.mxu0 0
        %686 = vmatprep.subr.bf16.mxu0 0
        %687 = vmatpush1.bf16.xpose.msra.mxu0 0
        %688 = vmatprep.subr.bf16.mxu0 0
        %689 = vmatpush1.bf16.xpose.msra.mxu0 0
        %690 = vmatprep.subr.bf16.mxu0 0
        %691 = vmatpush1.bf16.xpose.msra.mxu0 0
        %692 = vmatprep.mubr.bf16.mxu0 0
        %693 = vmatmul.mubr.bf16.gmra.mrb[0].mxu0 %v655
        %v694 = vpop.f32.mrb[0].mxu0
        %v695 = vadd.f32 0.0, %v694
        %v696 = vpop.f32.mrb[0].mxu0
        %v697 = vpop.f32.mrb[0].mxu0
        %v698 = vpop.f32.mrb[0].mxu0
        %699 = vdwg.mxu0
        %vm700 = vcmask 64512
        %v701 = vsel %vm700, %v695, -inf
        %702 = vmax.xlane.f32.xlu0 %v701
        %v703 = vpop.xlane.xlu0 %702
        %v704 = vsub.f32 %v695, %v703
        %v705 = vmul.f32 %v704, 1.442695
        %v706 = vpow.pop %v705
        %v707 = vsel %vm700, %v706, 0.0
        %708 = vadd.xlane.f32.xlu0 %v707
        %v709 = vpop.xlane.xlu0 %708
        %v710 = vrcp.pop %v709
        %v711 = vmul.f32 %v706, %v710
        %v712 = vpack.c.bf16 %v711, %v711
        %v713 = vpack.c.bf16 %v646, %v646
        %v715 = vsel %vm700, %v712, 0
        %vm717 = vcmask 1043456
        %v719 = vsel %vm717, %v713, 0
        %721 = vmatprep.subr.bf16.mxu0 0
        %722 = vmatpush1.bf16.msra.mxu0 %v719
        %723 = vmatprep.subr.bf16.mxu0 0
        %724 = vmatpush1.bf16.msra.mxu0 0
        %725 = vmatprep.subr.bf16.mxu0 0
        %726 = vmatpush1.bf16.msra.mxu0 0
        %727 = vmatprep.subr.bf16.mxu0 0
        %728 = vmatpush1.bf16.msra.mxu0 0
        %729 = vmatprep.subr.bf16.mxu0 0
        %730 = vmatpush1.bf16.msra.mxu0 0
        %731 = vmatprep.subr.bf16.mxu0 0
        %732 = vmatpush1.bf16.msra.mxu0 0
        %733 = vmatprep.subr.bf16.mxu0 0
        %734 = vmatpush1.bf16.msra.mxu0 0
        %735 = vmatprep.subr.bf16.mxu0 0
        %736 = vmatpush1.bf16.msra.mxu0 0
        %737 = vmatprep.subr.bf16.mxu0 0
        %738 = vmatpush1.bf16.msra.mxu0 0
        %739 = vmatprep.subr.bf16.mxu0 0
        %740 = vmatpush1.bf16.msra.mxu0 0
        %741 = vmatprep.subr.bf16.mxu0 0
        %742 = vmatpush1.bf16.msra.mxu0 0
        %743 = vmatprep.subr.bf16.mxu0 0
        %744 = vmatpush1.bf16.msra.mxu0 0
        %745 = vmatprep.subr.bf16.mxu0 0
        %746 = vmatpush1.bf16.msra.mxu0 0
        %747 = vmatprep.subr.bf16.mxu0 0
        %748 = vmatpush1.bf16.msra.mxu0 0
        %749 = vmatprep.subr.bf16.mxu0 0
        %750 = vmatpush1.bf16.msra.mxu0 0
        %751 = vmatprep.subr.bf16.mxu0 0
        %752 = vmatpush1.bf16.msra.mxu0 0
        %753 = vmatprep.mubr.bf16.mxu0 0
        %754 = vmatmul.mubr.bf16.gmra.mrb[0].mxu0 %v715
        %v755 = vpop.f32.mrb[0].mxu0
        %v756 = vadd.f32 0.0, %v755
        %v757 = vpop.f32.mrb[0].mxu0
        %v758 = vpop.f32.mrb[0].mxu0
        %v759 = vpop.f32.mrb[0].mxu0
        %760 = vdwg.mxu0
        %v761 = vld [vmem:[#allocation4] sm:$0xff]
        %v762 = vpack.c.bf16 %v756, %v756
        %v764 = vsel %vm653, %v762, 0
        %vm766 = vcmask 1041408
        %v768 = vsel %vm766, %v484, 0
        %770 = vmatprep.subr.bf16.mxu0 0
        %771 = vmatpush1.bf16.msra.mxu0 %v768
        %772 = vmatprep.subr.bf16.mxu0 0
        %773 = vmatpush1.bf16.msra.mxu0 0
        %774 = vmatprep.subr.bf16.mxu0 0
        %775 = vmatpush1.bf16.msra.mxu0 0
        %776 = vmatprep.subr.bf16.mxu0 0
        %777 = vmatpush1.bf16.msra.mxu0 0
        %778 = vmatprep.subr.bf16.mxu0 0
        %779 = vmatpush1.bf16.msra.mxu0 0
        %780 = vmatprep.subr.bf16.mxu0 0
        %781 = vmatpush1.bf16.msra.mxu0 0
        %782 = vmatprep.subr.bf16.mxu0 0
        %783 = vmatpush1.bf16.msra.mxu0 0
        %784 = vmatprep.subr.bf16.mxu0 0
        %785 = vmatpush1.bf16.msra.mxu0 0
        %786 = vmatprep.subr.bf16.mxu0 0
        %787 = vmatpush1.bf16.msra.mxu0 0
        %788 = vmatprep.subr.bf16.mxu0 0
        %789 = vmatpush1.bf16.msra.mxu0 0
        %790 = vmatprep.subr.bf16.mxu0 0
        %791 = vmatpush1.bf16.msra.mxu0 0
        %792 = vmatprep.subr.bf16.mxu0 0
        %793 = vmatpush1.bf16.msra.mxu0 0
        %794 = vmatprep.subr.bf16.mxu0 0
        %795 = vmatpush1.bf16.msra.mxu0 0
        %796 = vmatprep.subr.bf16.mxu0 0
        %797 = vmatpush1.bf16.msra.mxu0 0
        %798 = vmatprep.subr.bf16.mxu0 0
        %799 = vmatpush1.bf16.msra.mxu0 0
        %800 = vmatprep.subr.bf16.mxu0 0
        %801 = vmatpush1.bf16.msra.mxu0 0
        %802 = vmatprep.mubr.bf16.mxu0 0
        %803 = vmatmul.mubr.bf16.gmra.mrb[0].mxu0 %v764
        %v804 = vpop.f32.mrb[0].mxu0
        %v805 = vadd.f32 0.0, %v804
        %v806 = vpop.f32.mrb[0].mxu0
        %v807 = vpop.f32.mrb[0].mxu0
        %v808 = vpop.f32.mrb[0].mxu0
        %809 = vdwg.mxu0
        %v810 = vadd.f32 %v761, %v805
        %811 = vst.msk [vmem:[#allocation4] sm:$0xff] %vm499, %v810
        %p812 = scmp.eq.s32.totalorder %s29, 7
        // Predicated region
        $region57: #{tpu_custom_call.1} parent=51 // pred_check
          %p813 = pneg %p812
        $region58: #{tpu_custom_call.1} parent=51 // pred_check_branch
          %815 = sbr.rel (%p813) target = $region60
        $region59: #{tpu_custom_call.1} parent=51 // pred_region
          %v816 = vld [vmem:[#allocation4] sm:$0xff]
          %817 = vst.msk [vmem:[%s396] sm:$0xff] %vm499, %v816
        $region60: #{tpu_custom_call.1} parent=51 // pred_fallthru
          _
        %s818 = sand.u32 %s251, 1
        %s819 = scalar_lea.sflag [#allocation6], %s818
        %s820 = sand.u32 %s251, 1
        %s821 = smul.addr %s820, 8
        %s822 = scalar_lea.vmem [#allocation5], %s821
        // Predicated region
        $region61: #{tpu_custom_call.1} parent=51 // pred_check
          %p823 = pneg %p261
        $region62: #{tpu_custom_call.1} parent=51 // pred_check_branch
          %825 = sbr.rel (%p823) target = $region64
        $region63: #{tpu_custom_call.1} parent=51 // pred_region
          %s827 = ssub.s32 128, 128
          %828 = vsyncadd %s819, %s827
          %s829 = sadd.s32 %s28, %s27
          %s830 = smul.addr %s829, 128
          %s831 = scalar_lea.hbm %s8, %s830
          %s833 = sshll.u32 %s822, 4
          %s834 = int_to_ptr.vmem [resolvable:$true] %s833
          %836 = dma.vmem_to_hbm [thread:$0]  %s834, 128, %s831, %s819
        $region64: #{tpu_custom_call.1} parent=51 // pred_fallthru
          _
      $region52: #{tpu_custom_call.1} parent=5 // pred_fallthru
        _
      %p837 = scmp.le.s32.totalorder 2, %s17
      // Predicated region
      $region65: #{tpu_custom_call.1} parent=5 // pred_check
        %p838 = pneg %p837
      $region66: #{tpu_custom_call.1} parent=5 // pred_check_branch
        %840 = sbr.rel (%p838) target = $region68
      $region67: #{tpu_custom_call.1} parent=5 // pred_region
        %s841 = ssub.s32 %s17, 2
        // Predicated region
        $region69: #{tpu_custom_call.1} parent=67 // pred_check
          %p842 = pneg %p267
        $region70: #{tpu_custom_call.1} parent=67 // pred_check_branch
          %844 = sbr.rel (%p842) target = $region72
        $region71: #{tpu_custom_call.1} parent=67 // pred_region
          %s845 = sand.u32 %s252, 1
          %s846 = scalar_lea.sflag [#allocation6], %s845
          %s847 = sand.u32 %s252, 1
          %s848 = smul.addr %s847, 8
          %s849 = scalar_lea.vmem [#allocation5], %s848
          %850 = dma.done %s846, 128
        $region72: #{tpu_custom_call.1} parent=67 // pred_fallthru
          _
      $region68: #{tpu_custom_call.1} parent=5 // pred_fallthru
        _
    $region6: #{tpu_custom_call.1} parent=1 // loop_footer
      %s21 = sadd.s32 1, %s17
    $region7: #{tpu_custom_call.1} parent=1 // loop_footer_branch
      %16 = sbr.rel target = $region3
    $region8: #{tpu_custom_call.1} parent=1 // loop_exit
      _
    %851 = vsyncpa [#allocation6], 1
    %s852 = scalar_lea.sflag [#allocation6], 1
    %853 = vsyncpa %s852, 1

</llo_original>
